<compile_context>
chip_gen: v6e
topology: v6e:2x2x1
jax: 0.10.0
libtpu: 0.0.40
codegen_flags: <defaults>
</compile_context>

<pallas_src>
import jax
import jax.numpy as jnp
from jax import lax
from jax.experimental import pallas as pl
from jax.experimental.pallas import tpu as pltpu

_LANES = 128
_SUBLANES = 8

# Per-generation defaults:
#   budget     : VMEM bytes allowed for (input pipeline + f32 temporaries)
#   vmem_limit : explicit scoped-VMEM limit to request (None -> leave default)
#   splits     : reduction splits (2 only where there are 2 TensorCores / chip)
_GEN_DEFAULTS = {
    "v7":      dict(budget=36 << 20, vmem_limit=48 << 20, splits=2),  # 64 MiB phys/TC
    "v6":      dict(budget=40 << 20, vmem_limit=64 << 20, splits=1),  # 128 MiB phys
    "v5e":     dict(budget=10 << 20, vmem_limit=None,     splits=1),  # 16 MiB scoped default
    "unknown": dict(budget=10 << 20, vmem_limit=None,     splits=1),
}


def _tpu_generation():
    try:
        kind = jax.devices()[0].device_kind.lower()
    except Exception:
        return "unknown"
    if "v7" in kind:
        return "v7"
    if "v6" in kind:
        return "v6"
    if "v5e" in kind or "v5 lite" in kind or "v5litepod" in kind:
        return "v5e"
    return "unknown"


def _make_kernel(*, n_splits, bps, tr, rows, binary_target):
    """Kernel accumulating lane-partial sums per sample into a (B, 4*128) slab.

    Inputs  p_ref/t_ref : (B, tr, 128) tile (native dtype, cast to f32 here).
    Output  out_ref     : (B, 512) f32, resident across the reduction axis,
                          lanes [0:128)=sum(llh), [128:256)=sum(p*t),
                          [256:384)=sum(p), [384:512)=sum(t).
    """
    nb = n_splits * bps
    valid_last = rows - (nb - 1) * tr          # valid rows in the final block (1..tr)
    ragged = valid_last != tr                  # static: does the last block overhang?

    def accumulate(p, t, out_ref):
        # torch.nn.BCELoss clamps each log term at -100.
        log_p = jnp.maximum(jnp.log(p), -100.0)
        log_1mp = jnp.maximum(jnp.log(1.0 - p), -100.0)
        if binary_target:
            # Valid only for hard {0,1} targets: saves a mul+add per element.
            llh = jnp.where(t != 0.0, log_p, log_1mp)
        else:
            llh = t * (log_p - log_1mp) + log_1mp      # == t*log(p) + (1-t)*log(1-p)
        # Reduce only the row (sublane) axis; keep 128 lane partials per stat.
        # The BCE negation is deferred to the host-side finalization.
        out_ref[:, 0 * _LANES:1 * _LANES] += jnp.sum(llh, axis=1)
        out_ref[:, 1 * _LANES:2 * _LANES] += jnp.sum(p * t, axis=1)
        out_ref[:, 2 * _LANES:3 * _LANES] += jnp.sum(p, axis=1)
        out_ref[:, 3 * _LANES:4 * _LANES] += jnp.sum(t, axis=1)

    def kernel(p_ref, t_ref, out_ref):
        j = pl.program_id(1)

        @pl.when(j == 0)
        def _():
            out_ref[...] = jnp.zeros_like(out_ref)

        p = p_ref[...].astype(jnp.float32)
        t = t_ref[...].astype(jnp.float32)

        if not ragged:
            accumulate(p, t, out_ref)
        else:
            # Only the very last block overhangs the row extent; pay the masking
            # cost only there (pl.when skips the other path at runtime).
            is_last = (pl.program_id(0) == n_splits - 1) & (j == bps - 1)

            @pl.when(jnp.logical_not(is_last))
            def _():
                accumulate(p, t, out_ref)

            @pl.when(is_last)
            def _():
                row_ids = lax.broadcasted_iota(jnp.int32, p.shape, 1)
                m = row_ids < valid_last
                # Masked elements become p=t=0, which contribute exactly 0 to
                # every partial (llh(0,0) = 0 thanks to the -100 clamp).
                accumulate(jnp.where(m, p, 0.0), jnp.where(m, t, 0.0), out_ref)

    return kernel


def bce_dice_loss(pred, target, *, tile_rows=None, vmem_budget_bytes=None,
                  n_splits=None, assume_binary_target=False):
    """pred/target: (B, C, H, W) arrays, pred in (0, 1). Returns scalar f32."""
    B = pred.shape[0]
    p = pred.reshape(B, -1)
    t = target.reshape(B, -1)
    N = p.shape[1]                       # BCE 'mean' denominator uses original N

    gen = _tpu_generation()
    defaults = _GEN_DEFAULTS[gen]
    budget = defaults["budget"] if vmem_budget_bytes is None else int(vmem_budget_bytes)
    vmem_limit = defaults["vmem_limit"]

    # Lane-align: (B, N) -> (B, rows, 128). Free (pure reshape) when N % 128 == 0;
    # otherwise a minimal (<128 elems/sample) zero pad — zeros contribute exactly
    # 0 to all four partial sums.
    # TODO(synk): fully copy-free handling of non-128-aligned N (manual tail DMA)
    # if that case ever matters.
    rows = pl.cdiv(N, _LANES)
    lane_pad = rows * _LANES - N
    if lane_pad:
        p = jnp.pad(p, ((0, 0), (0, lane_pad)))
        t = jnp.pad(t, ((0, 0), (0, lane_pad)))
    p3 = p.reshape(B, rows, _LANES)
    t3 = t.reshape(B, rows, _LANES)

    # Tile rows from the VMEM budget, accounting for the double-buffered input
    # pipeline (2 arrays x 2 buffers, native dtype) plus ~6 block-sized f32
    # temporaries that the elementwise log chain may materialize.
    isz = p.dtype.itemsize + t.dtype.itemsize
    bytes_per_row = B * _LANES * (2 * isz + 6 * 4)
    tr_max = max(_SUBLANES, budget // bytes_per_row)   # floor (may exceed budget for huge B)
    if tile_rows is not None:
        tr_max = max(_SUBLANES, min(tr_max, int(tile_rows)))

    if rows <= tr_max:
        tr = rows                        # single block == full row extent (always legal)
        nb = 1
    else:
        tr = max(_SUBLANES, (tr_max // _SUBLANES) * _SUBLANES)
        nb = pl.cdiv(rows, tr)

    # Reduction split across TensorCores: worth it only on 2-TC chips (v7x) and
    # only when each split keeps its DMA pipeline full; require nb % n_splits == 0
    # so only the globally-last block can be ragged.
    if n_splits is None:
        n_splits = defaults["splits"]
        if n_splits > 1 and (nb < 4 * n_splits or nb % n_splits != 0):
            n_splits = 1
    else:
        n_splits = int(n_splits)
        if n_splits < 1 or nb % n_splits != 0:
            n_splits = 1
    bps = nb // n_splits

    kernel = _make_kernel(n_splits=n_splits, bps=bps, tr=tr, rows=rows,
                          binary_target=assume_binary_target)

    in_spec = pl.BlockSpec((B, tr, _LANES), lambda s, j: (0, s * bps + j, 0))
    out_spec = pl.BlockSpec((None, B, 4 * _LANES), lambda s, j: (s, 0, 0))

    cp_kwargs = dict(dimension_semantics=("parallel", "arbitrary"))
    if vmem_limit is not None:
        cp_kwargs["vmem_limit_bytes"] = int(vmem_limit)

    partials = pl.pallas_call(
        kernel,
        out_shape=jax.ShapeDtypeStruct((n_splits, B, 4 * _LANES), jnp.float32),
        grid_spec=pltpu.PrefetchScalarGridSpec(
            num_scalar_prefetch=0,
            grid=(n_splits, bps),
            in_specs=[in_spec, in_spec],
            out_specs=out_spec,
        ),
        compiler_params=pltpu.CompilerParams(**cp_kwargs),
    )(p3, t3)

    # Tiny finalization over the (n_splits, B, 512) lane partials in plain JAX.
    smooth = 1.0
    parts = jnp.sum(partials, axis=0)                              # (B, 512)
    llh = jnp.sum(parts[:, 0 * _LANES:1 * _LANES])                 # sum t*log p + (1-t)*log(1-p)
    inter = jnp.sum(parts[:, 1 * _LANES:2 * _LANES], axis=-1)      # (B,)
    psum = jnp.sum(parts[:, 2 * _LANES:3 * _LANES], axis=-1)
    tsum = jnp.sum(parts[:, 3 * _LANES:4 * _LANES], axis=-1)
    bce_mean = -llh / jnp.float32(B * N)                           # negation deferred to here
    dice_score = (2.0 * inter + smooth) / (psum + tsum + smooth)
    dice_loss = 1.0 - jnp.sum(dice_score) / jnp.float32(B)
    return bce_mean + dice_loss


def _reference(pred, target):
    """Plain-JAX reference matching the PyTorch module semantics."""
    B = pred.shape[0]
    p = pred.reshape(B, -1).astype(jnp.float32)
    t = target.reshape(B, -1).astype(jnp.float32)
    log_p = jnp.maximum(jnp.log(p), -100.0)
    log_1mp = jnp.maximum(jnp.log(1.0 - p), -100.0)
    bce = jnp.mean(-(t * log_p + (1.0 - t) * log_1mp))
    smooth = 1.0
    inter = jnp.sum(p * t, axis=1)
    dice_score = (2.0 * inter + smooth) / (jnp.sum(p, axis=1) + jnp.sum(t, axis=1) + smooth)
    dice_loss = 1.0 - jnp.sum(dice_score) / B
    return bce + dice_loss


if __name__ == "__main__":
    key = jax.random.PRNGKey(0)
    k1, k2, k3, k4 = jax.random.split(key, 4)

    # Case 1: module-sized input (B, C, H, W) = (2, 4, 16, 16); N is lane-aligned,
    # single block, no padding, no masking.
    B, C, H, W = 2, 4, 16, 16
    pred = jax.nn.sigmoid(jax.random.normal(k1, (B, C, H, W), dtype=jnp.float32))
    target = (jax.random.uniform(k2, (B, C, H, W)) > 0.5).astype(jnp.float32)
    loss = jax.block_until_ready(bce_dice_loss(pred, target))
    ref = _reference(pred, target)
    assert jnp.allclose(loss, ref, rtol=1e-4, atol=1e-5), (loss, ref)

    # Case 2: non-lane-aligned N (1728 -> 14 rows), forced small tiles and a
    # forced 2-way reduction split — exercises the lane-tail zeros, the in-kernel
    # ragged last-block mask, and the per-split resident accumulators.
    B2, C2, H2, W2 = 2, 3, 24, 24
    pred2 = jax.nn.sigmoid(jax.random.normal(k3, (B2, C2, H2, W2), dtype=jnp.float32))
    target2 = (jax.random.uniform(k4, (B2, C2, H2, W2)) > 0.5).astype(jnp.float32)
    loss2 = jax.block_until_ready(
        bce_dice_loss(pred2, target2, tile_rows=8, n_splits=2))
    ref2 = _reference(pred2, target2)
    assert jnp.allclose(loss2, ref2, rtol=1e-4, atol=1e-5), (loss2, ref2)

    print("KERNEL_OK")
</pallas_src>

<mosaic_0001>
module attributes {stable_mosaic.version = 11 : i64} {
  func.func @kernel(%arg0: i32, %arg1: i32, %arg2: memref<2x8x128xf32, #tpu.memory_space<vmem>>, %arg3: memref<2x8x128xf32, #tpu.memory_space<vmem>>, %arg4: memref<1x2x512xf32, #tpu.memory_space<vmem>>) attributes {dimension_semantics = [#tpu.dimension_semantics<parallel>, #tpu.dimension_semantics<arbitrary>], iteration_bounds = array<i64: 1, 1>, scalar_prefetch = 0 : i64, scratch_operands = 0 : i64, tpu.core_type = #tpu.core_type<tc>, window_params = [{transform_indices = @transform_0, window_bounds = array<i64: 2, 8, 128>}, {transform_indices = @transform_1, window_bounds = array<i64: 2, 8, 128>}, {transform_indices = @transform_2, window_bounds = array<i64: 1, 2, 512>}]} {
    %c0_i32 = arith.constant 0 : i32
    %0 = arith.cmpi eq, %arg1, %c0_i32 : i32
    %1 = arith.extui %0 : i1 to i32
    %c0_i32_0 = arith.constant 0 : i32
    %2 = arith.cmpi ne, %1, %c0_i32_0 : i32
    scf.if %2 {
      %cst_33 = arith.constant 0.000000e+00 : f32
      %45 = vector.broadcast %cst_33 : f32 to vector<2x512xf32>
      %c0_34 = arith.constant 0 : index
      %c0_35 = arith.constant 0 : index
      %c0_36 = arith.constant 0 : index
      %46 = vector.load %arg4[%c0_34, %c0_35, %c0_36] : memref<1x2x512xf32, #tpu.memory_space<vmem>>, vector<1x2x512xf32>
      %47 = vector.shape_cast %46 : vector<1x2x512xf32> to vector<2x512xf32>
      %48 = vector.shape_cast %45 : vector<2x512xf32> to vector<1x2x512xf32>
      tpu.vector_store %arg4[%c0_34, %c0_35, %c0_36], %48 {strides = array<i32>} : memref<1x2x512xf32, #tpu.memory_space<vmem>>, vector<1x2x512xf32>,
    } else {
    }
    %c0 = arith.constant 0 : index
    %c0_1 = arith.constant 0 : index
    %c0_2 = arith.constant 0 : index
    %3 = vector.load %arg2[%c0, %c0_1, %c0_2] : memref<2x8x128xf32, #tpu.memory_space<vmem>>, vector<2x8x128xf32>
    %c0_3 = arith.constant 0 : index
    %c0_4 = arith.constant 0 : index
    %c0_5 = arith.constant 0 : index
    %4 = vector.load %arg3[%c0_3, %c0_4, %c0_5] : memref<2x8x128xf32, #tpu.memory_space<vmem>>, vector<2x8x128xf32>
    %5 = math.log %3 : vector<2x8x128xf32>
    %cst = arith.constant -1.000000e+02 : f32
    %6 = vector.broadcast %cst : f32 to vector<2x8x128xf32>
    %7 = arith.maximumf %5, %6 : vector<2x8x128xf32>
    %cst_6 = arith.constant 1.000000e+00 : f32
    %8 = vector.broadcast %cst_6 : f32 to vector<2x8x128xf32>
    %9 = arith.subf %8, %3 : vector<2x8x128xf32>
    %10 = math.log %9 : vector<2x8x128xf32>
    %cst_7 = arith.constant -1.000000e+02 : f32
    %11 = vector.broadcast %cst_7 : f32 to vector<2x8x128xf32>
    %12 = arith.maximumf %10, %11 : vector<2x8x128xf32>
    %13 = arith.subf %7, %12 : vector<2x8x128xf32>
    %14 = arith.mulf %4, %13 : vector<2x8x128xf32>
    %15 = arith.addf %14, %12 : vector<2x8x128xf32>
    %c0_8 = arith.constant 0 : index
    %c0_9 = arith.constant 0 : index
    %c0_10 = arith.constant 0 : index
    %16 = vector.load %arg4[%c0_8, %c0_9, %c0_10] : memref<1x2x512xf32, #tpu.memory_space<vmem>>, vector<1x2x128xf32>
    %17 = vector.shape_cast %16 : vector<1x2x128xf32> to vector<2x128xf32>
    %cst_11 = arith.constant dense<0.000000e+00> : vector<2x128xf32>
    %18 = vector.multi_reduction <add>, %15, %cst_11 [1] : vector<2x8x128xf32> to vector<2x128xf32>
    %19 = arith.addf %17, %18 : vector<2x128xf32>
    %c0_12 = arith.constant 0 : index
    %c0_13 = arith.constant 0 : index
    %c0_14 = arith.constant 0 : index
    %20 = vector.load %arg4[%c0_12, %c0_13, %c0_14] : memref<1x2x512xf32, #tpu.memory_space<vmem>>, vector<1x2x128xf32>
    %21 = vector.shape_cast %20 : vector<1x2x128xf32> to vector<2x128xf32>
    %22 = vector.shape_cast %19 : vector<2x128xf32> to vector<1x2x128xf32>
    tpu.vector_store %arg4[%c0_12, %c0_13, %c0_14], %22 {strides = array<i32>} : memref<1x2x512xf32, #tpu.memory_space<vmem>>, vector<1x2x128xf32>,
    %c0_15 = arith.constant 0 : index
    %c0_16 = arith.constant 0 : index
    %c128 = arith.constant 128 : index
    %23 = vector.load %arg4[%c0_15, %c0_16, %c128] : memref<1x2x512xf32, #tpu.memory_space<vmem>>, vector<1x2x128xf32>
    %24 = vector.shape_cast %23 : vector<1x2x128xf32> to vector<2x128xf32>
    %25 = arith.mulf %3, %4 : vector<2x8x128xf32>
    %cst_17 = arith.constant dense<0.000000e+00> : vector<2x128xf32>
    %26 = vector.multi_reduction <add>, %25, %cst_17 [1] : vector<2x8x128xf32> to vector<2x128xf32>
    %27 = arith.addf %24, %26 : vector<2x128xf32>
    %c0_18 = arith.constant 0 : index
    %c0_19 = arith.constant 0 : index
    %c128_20 = arith.constant 128 : index
    %28 = vector.load %arg4[%c0_18, %c0_19, %c128_20] : memref<1x2x512xf32, #tpu.memory_space<vmem>>, vector<1x2x128xf32>
    %29 = vector.shape_cast %28 : vector<1x2x128xf32> to vector<2x128xf32>
    %30 = vector.shape_cast %27 : vector<2x128xf32> to vector<1x2x128xf32>
    tpu.vector_store %arg4[%c0_18, %c0_19, %c128_20], %30 {strides = array<i32>} : memref<1x2x512xf32, #tpu.memory_space<vmem>>, vector<1x2x128xf32>,
    %c0_21 = arith.constant 0 : index
    %c0_22 = arith.constant 0 : index
    %c256 = arith.constant 256 : index
    %31 = vector.load %arg4[%c0_21, %c0_22, %c256] : memref<1x2x512xf32, #tpu.memory_space<vmem>>, vector<1x2x128xf32>
    %32 = vector.shape_cast %31 : vector<1x2x128xf32> to vector<2x128xf32>
    %cst_23 = arith.constant dense<0.000000e+00> : vector<2x128xf32>
    %33 = vector.multi_reduction <add>, %3, %cst_23 [1] : vector<2x8x128xf32> to vector<2x128xf32>
    %34 = arith.addf %32, %33 : vector<2x128xf32>
    %c0_24 = arith.constant 0 : index
    %c0_25 = arith.constant 0 : index
    %c256_26 = arith.constant 256 : index
    %35 = vector.load %arg4[%c0_24, %c0_25, %c256_26] : memref<1x2x512xf32, #tpu.memory_space<vmem>>, vector<1x2x128xf32>
    %36 = vector.shape_cast %35 : vector<1x2x128xf32> to vector<2x128xf32>
    %37 = vector.shape_cast %34 : vector<2x128xf32> to vector<1x2x128xf32>
    tpu.vector_store %arg4[%c0_24, %c0_25, %c256_26], %37 {strides = array<i32>} : memref<1x2x512xf32, #tpu.memory_space<vmem>>, vector<1x2x128xf32>,
    %c0_27 = arith.constant 0 : index
    %c0_28 = arith.constant 0 : index
    %c384 = arith.constant 384 : index
    %38 = vector.load %arg4[%c0_27, %c0_28, %c384] : memref<1x2x512xf32, #tpu.memory_space<vmem>>, vector<1x2x128xf32>
    %39 = vector.shape_cast %38 : vector<1x2x128xf32> to vector<2x128xf32>
    %cst_29 = arith.constant dense<0.000000e+00> : vector<2x128xf32>
    %40 = vector.multi_reduction <add>, %4, %cst_29 [1] : vector<2x8x128xf32> to vector<2x128xf32>
    %41 = arith.addf %39, %40 : vector<2x128xf32>
    %c0_30 = arith.constant 0 : index
    %c0_31 = arith.constant 0 : index
    %c384_32 = arith.constant 384 : index
    %42 = vector.load %arg4[%c0_30, %c0_31, %c384_32] : memref<1x2x512xf32, #tpu.memory_space<vmem>>, vector<1x2x128xf32>
    %43 = vector.shape_cast %42 : vector<1x2x128xf32> to vector<2x128xf32>
    %44 = vector.shape_cast %41 : vector<2x128xf32> to vector<1x2x128xf32>
    tpu.vector_store %arg4[%c0_30, %c0_31, %c384_32], %44 {strides = array<i32>} : memref<1x2x512xf32, #tpu.memory_space<vmem>>, vector<1x2x128xf32>,
    return
  }
  func.func @transform_0(%arg0: i32, %arg1: i32) -> (i32, i32, i32) {
    %c1_i32 = arith.constant 1 : i32
    %0 = arith.muli %arg0, %c1_i32 : i32
    %1 = arith.addi %0, %arg1 : i32
    %c0_i32 = arith.constant 0 : i32
    %c0_i32_0 = arith.constant 0 : i32
    %c0_i32_1 = arith.constant 0 : i32
    return %c0_i32, %1, %c0_i32_0 : i32, i32, i32
  }
  func.func @transform_1(%arg0: i32, %arg1: i32) -> (i32, i32, i32) {
    %c1_i32 = arith.constant 1 : i32
    %0 = arith.muli %arg0, %c1_i32 : i32
    %1 = arith.addi %0, %arg1 : i32
    %c0_i32 = arith.constant 0 : i32
    %c0_i32_0 = arith.constant 0 : i32
    %c0_i32_1 = arith.constant 0 : i32
    return %c0_i32, %1, %c0_i32_0 : i32, i32, i32
  }
  func.func @transform_2(%arg0: i32, %arg1: i32) -> (i32, i32, i32) {
    %c0_i32 = arith.constant 0 : i32
    %c0_i32_0 = arith.constant 0 : i32
    %c0_i32_1 = arith.constant 0 : i32
    return %arg0, %c0_i32, %c0_i32_0 : i32, i32, i32
  }
}

</mosaic_0001>

<llo_original>
// kernel: tpu_custom_call.1
$region0: #{tpu_custom_call.1}
  #allocation0 [shape = 'u32[]', space=smem, size = 0x4, offset = 0x4, fixed_abs, tag = 'smem constant byte address 0x4 - core index']
  #allocation1 [shape = 'u32[144,128]{1,0:T(1,128)}', space=vmem, size = 0x12000, scoped, tag = 'internal scratch']
  %s0 = inlined_call_operand.hbm [shape: f32[2,8,128], index: 0, kind: input, shape index: {}]
  %s1 = inlined_call_operand.hbm [shape: f32[2,8,128], index: 1, kind: input, shape index: {}]
  %s2 = inlined_call_operand.hbm [shape: f32[1,2,512], index: 2, kind: output, shape index: {}]
  %s3 = sld [smem:[#allocation0]]
  $region30: #{tpu_custom_call.1} parent=0
    _
  %s5 = ssub.s32 1, %s3
  %s6 = scalar_select 0, %s5, %s3
  $region1: #{tpu_custom_call.1} parent=0
    #allocation2 [shape = 'u8[8192]{0}', space=vmem, size = 0x2000, scoped, tag = 'input window, operand 0, single buffered']
    #allocation3 [shape = 's32[1]{0}', space=sflag, size = 0x4, scoped, tag = 'scoped memory for tpu_custom_call.1']
    #allocation4 [shape = 's32[1]{0}', space=sflag, size = 0x4, scoped, tag = 'scoped memory for tpu_custom_call.1']
    #allocation5 [shape = 'u8[8192]{0}', space=vmem, size = 0x2000, scoped, tag = 'input window, operand 1, single buffered']
    #allocation6 [shape = 's32[1]{0}', space=sflag, size = 0x4, scoped, tag = 'scoped memory for tpu_custom_call.1']
    #allocation7 [shape = 'u8[4096]{0}', space=vmem, size = 0x1000, scoped, tag = 'output window, operand 0, single buffered']
    %7 = vsyncpa [#allocation3], 0
    %8 = vsyncpa [#allocation6], 0
    %9 = vsyncpa [#allocation4], 0
    // Predicated region
    $region2: #{tpu_custom_call.1} parent=1 // pred_check
      _
    $region3: #{tpu_custom_call.1} parent=1 // pred_check_branch
      %11 = sbr.rel (0) target = $region5
    $region4: #{tpu_custom_call.1} parent=1 // pred_region
      %s12 = sadd.s32 0, 0
      %s14 = ssub.s32 256, 256
      %15 = vsyncadd [#allocation3], %s14
      %s16 = smul.addr %s12, 128
      %s17 = scalar_lea.hbm %s0, %s16
      %s18 = sshll.u32 [#allocation2], 4
      %s19 = int_to_ptr.vmem [resolvable:$true] %s18
      %24 = dma.hbm_to_vmem [thread:$0]  %s17, 256, %s19, [#allocation3], 128, 128, 8
    $region5: #{tpu_custom_call.1} parent=1 // pred_fallthru
      _
    // Predicated region
    $region6: #{tpu_custom_call.1} parent=1 // pred_check
      _
    $region7: #{tpu_custom_call.1} parent=1 // pred_check_branch
      %26 = sbr.rel (0) target = $region9
    $region8: #{tpu_custom_call.1} parent=1 // pred_region
      %s27 = sadd.s32 0, 0
      %s29 = ssub.s32 256, 256
      %30 = vsyncadd [#allocation6], %s29
      %s31 = smul.addr %s27, 128
      %s32 = scalar_lea.hbm %s1, %s31
      %s33 = sshll.u32 [#allocation5], 4
      %s34 = int_to_ptr.vmem [resolvable:$true] %s33
      %39 = dma.hbm_to_vmem [thread:$0]  %s32, 256, %s34, [#allocation6], 128, 128, 8
    $region9: #{tpu_custom_call.1} parent=1 // pred_fallthru
      _
    // Predicated region
    $region10: #{tpu_custom_call.1} parent=1 // pred_check
      _
    $region11: #{tpu_custom_call.1} parent=1 // pred_check_branch
      %41 = sbr.rel (0) target = $region13
    $region12: #{tpu_custom_call.1} parent=1 // pred_region
      %42 = dma.done [#allocation3], 256
    $region13: #{tpu_custom_call.1} parent=1 // pred_fallthru
      _
    // Predicated region
    $region14: #{tpu_custom_call.1} parent=1 // pred_check
      _
    $region15: #{tpu_custom_call.1} parent=1 // pred_check_branch
      %44 = sbr.rel (0) target = $region17
    $region16: #{tpu_custom_call.1} parent=1 // pred_region
      %45 = dma.done [#allocation6], 256
    $region17: #{tpu_custom_call.1} parent=1 // pred_fallthru
      _
    %s46 = sadd.s32 0, 0
    %s47 = sadd.s32 0, 0
    %p48 = scmp.eq.s32.totalorder 0, 0
    // Predicated region
    $region18: #{tpu_custom_call.1} parent=1 // pred_check
      %p49 = pneg %p48
    $region19: #{tpu_custom_call.1} parent=1 // pred_check_branch
      %51 = sbr.rel (%p49) target = $region21
    $region20: #{tpu_custom_call.1} parent=1 // pred_region
      %52 = vst [vmem:[#allocation7] sm:$0xff] 0.0
    $region21: #{tpu_custom_call.1} parent=1 // pred_fallthru
      _
    %v53 = vld [vmem:[#allocation2] sm:$0xff]
    %v54 = vld [vmem:[#allocation2 + $0x8] sm:$0xff]
    %v55 = vld [vmem:[#allocation5] sm:$0xff]
    %v56 = vld [vmem:[#allocation5 + $0x8] sm:$0xff]
    %v57 = vlog2.pop %v53
    %v58 = vmul.f32 %v57, 0.6931472
    %v59 = vlog2.pop %v54
    %v60 = vmul.f32 %v59, 0.6931472
    %v61 = vmax.f32 %v58, -100.0
    %v62 = vmax.f32 %v60, -100.0
    %v63 = vsub.f32 1.0, %v53
    %v64 = vsub.f32 1.0, %v54
    %v65 = vlog2.pop %v63
    %v66 = vmul.f32 %v65, 0.6931472
    %v67 = vlog2.pop %v64
    %v68 = vmul.f32 %v67, 0.6931472
    %v69 = vmax.f32 %v66, -100.0
    %v70 = vmax.f32 %v68, -100.0
    %v71 = vsub.f32 %v61, %v69
    %v72 = vsub.f32 %v62, %v70
    %v73 = vmul.f32 %v55, %v71
    %v74 = vmul.f32 %v56, %v72
    %v75 = vadd.f32 %v73, %v69
    %v76 = vadd.f32 %v74, %v70
    %v77 = vld [vmem:[#allocation7] sm:$0x3]
    %v78 = vrot.slane %v75, 4
    %v79 = vadd.f32 %v75, %v78
    %v80 = vrot.slane %v79, 2
    %v81 = vadd.f32 %v79, %v80
    %v82 = vrot.slane %v81, 1
    %v83 = vadd.f32 %v81, %v82
    %v84 = vrot.slane %v76, 4
    %v85 = vadd.f32 %v76, %v84
    %v86 = vrot.slane %v85, 2
    %v87 = vadd.f32 %v85, %v86
    %v88 = vrot.slane %v87, 1
    %v89 = vadd.f32 %v87, %v88
    %v93 = vunpack.c.l.s4 1983009808
    %v94 = vunpack.c.0.s8 %v93
    %v95 = vlaneseq
    %v96 = vshrl.u32 %v95, 7
    %v97 = vsub.s32 %v94, %v96
    %v98 = vrot.slane %v83, %v97
    %v100 = vunpack.c.l.s4 1983009808
    %v101 = vunpack.c.0.s8 %v100
    %v102 = vlaneseq
    %v103 = vshrl.u32 %v102, 7
    %v104 = vsub.s32 %v101, %v103
    %v105 = vrot.slane %v89, %v104
    %vm106 = vcmask 1044484
    %v107 = vsel %vm106, %v98, %v98
    %vm108 = vcmask 1046534
    %v109 = vsel %vm108, %v98, %v107
    %v110 = vrot.slane %v105, 7
    %vm111 = vcmask 1041409
    %v112 = vsel %vm111, %v110, %v109
    %vm113 = vcmask 1043459
    %v114 = vsel %vm113, %v110, %v112
    %vm115 = vcmask 1045509
    %v116 = vsel %vm115, %v110, %v114
    %vm117 = vcmask 1047559
    %v118 = vsel %vm117, %v110, %v116
    %v120 = vadd.f32 %v77, %v118
    %121 = vst [vmem:[#allocation7] sm:$0x3] %v120
    %v122 = vld [vmem:[#allocation7 + $0x2] sm:$0x3]
    %v123 = vmul.f32 %v53, %v55
    %v124 = vmul.f32 %v54, %v56
    %v125 = vrot.slane %v123, 4
    %v126 = vadd.f32 %v123, %v125
    %v127 = vrot.slane %v126, 2
    %v128 = vadd.f32 %v126, %v127
    %v129 = vrot.slane %v128, 1
    %v130 = vadd.f32 %v128, %v129
    %v131 = vrot.slane %v124, 4
    %v132 = vadd.f32 %v124, %v131
    %v133 = vrot.slane %v132, 2
    %v134 = vadd.f32 %v132, %v133
    %v135 = vrot.slane %v134, 1
    %v136 = vadd.f32 %v134, %v135
    %v140 = vunpack.c.l.s4 1983009808
    %v141 = vunpack.c.0.s8 %v140
    %v142 = vlaneseq
    %v143 = vshrl.u32 %v142, 7
    %v144 = vsub.s32 %v141, %v143
    %v145 = vrot.slane %v130, %v144
    %v147 = vunpack.c.l.s4 1983009808
    %v148 = vunpack.c.0.s8 %v147
    %v149 = vlaneseq
    %v150 = vshrl.u32 %v149, 7
    %v151 = vsub.s32 %v148, %v150
    %v152 = vrot.slane %v136, %v151
    %v153 = vsel %vm106, %v145, %v145
    %v154 = vsel %vm108, %v145, %v153
    %v155 = vrot.slane %v152, 7
    %v156 = vsel %vm111, %v155, %v154
    %v157 = vsel %vm113, %v155, %v156
    %v158 = vsel %vm115, %v155, %v157
    %v159 = vsel %vm117, %v155, %v158
    %v161 = vadd.f32 %v122, %v159
    %162 = vst [vmem:[#allocation7 + $0x2] sm:$0x3] %v161
    %v163 = vld [vmem:[#allocation7 + $0x4] sm:$0x3]
    %v164 = vrot.slane %v53, 4
    %v165 = vadd.f32 %v53, %v164
    %v166 = vrot.slane %v165, 2
    %v167 = vadd.f32 %v165, %v166
    %v168 = vrot.slane %v167, 1
    %v169 = vadd.f32 %v167, %v168
    %v170 = vrot.slane %v54, 4
    %v171 = vadd.f32 %v54, %v170
    %v172 = vrot.slane %v171, 2
    %v173 = vadd.f32 %v171, %v172
    %v174 = vrot.slane %v173, 1
    %v175 = vadd.f32 %v173, %v174
    %v179 = vunpack.c.l.s4 1983009808
    %v180 = vunpack.c.0.s8 %v179
    %v181 = vlaneseq
    %v182 = vshrl.u32 %v181, 7
    %v183 = vsub.s32 %v180, %v182
    %v184 = vrot.slane %v169, %v183
    %v186 = vunpack.c.l.s4 1983009808
    %v187 = vunpack.c.0.s8 %v186
    %v188 = vlaneseq
    %v189 = vshrl.u32 %v188, 7
    %v190 = vsub.s32 %v187, %v189
    %v191 = vrot.slane %v175, %v190
    %v192 = vsel %vm106, %v184, %v184
    %v193 = vsel %vm108, %v184, %v192
    %v194 = vrot.slane %v191, 7
    %v195 = vsel %vm111, %v194, %v193
    %v196 = vsel %vm113, %v194, %v195
    %v197 = vsel %vm115, %v194, %v196
    %v198 = vsel %vm117, %v194, %v197
    %v200 = vadd.f32 %v163, %v198
    %201 = vst [vmem:[#allocation7 + $0x4] sm:$0x3] %v200
    %v202 = vld [vmem:[#allocation7 + $0x6] sm:$0x3]
    %v203 = vrot.slane %v55, 4
    %v204 = vadd.f32 %v55, %v203
    %v205 = vrot.slane %v204, 2
    %v206 = vadd.f32 %v204, %v205
    %v207 = vrot.slane %v206, 1
    %v208 = vadd.f32 %v206, %v207
    %v209 = vrot.slane %v56, 4
    %v210 = vadd.f32 %v56, %v209
    %v211 = vrot.slane %v210, 2
    %v212 = vadd.f32 %v210, %v211
    %v213 = vrot.slane %v212, 1
    %v214 = vadd.f32 %v212, %v213
    %v218 = vunpack.c.l.s4 1983009808
    %v219 = vunpack.c.0.s8 %v218
    %v220 = vlaneseq
    %v221 = vshrl.u32 %v220, 7
    %v222 = vsub.s32 %v219, %v221
    %v223 = vrot.slane %v208, %v222
    %v225 = vunpack.c.l.s4 1983009808
    %v226 = vunpack.c.0.s8 %v225
    %v227 = vlaneseq
    %v228 = vshrl.u32 %v227, 7
    %v229 = vsub.s32 %v226, %v228
    %v230 = vrot.slane %v214, %v229
    %v231 = vsel %vm106, %v223, %v223
    %v232 = vsel %vm108, %v223, %v231
    %v233 = vrot.slane %v230, 7
    %v234 = vsel %vm111, %v233, %v232
    %v235 = vsel %vm113, %v233, %v234
    %v236 = vsel %vm115, %v233, %v235
    %v237 = vsel %vm117, %v233, %v236
    %v239 = vadd.f32 %v202, %v237
    %240 = vst [vmem:[#allocation7 + $0x6] sm:$0x3] %v239
    // Predicated region
    $region22: #{tpu_custom_call.1} parent=1 // pred_check
      _
    $region23: #{tpu_custom_call.1} parent=1 // pred_check_branch
      %242 = sbr.rel (0) target = $region25
    $region24: #{tpu_custom_call.1} parent=1 // pred_region
      %s244 = ssub.s32 128, 128
      %245 = vsyncadd [#allocation4], %s244
      %s247 = sshll.u32 [#allocation7], 4
      %s248 = int_to_ptr.vmem [resolvable:$true] %s247
      %250 = dma.vmem_to_hbm [thread:$0]  %s248, 128, %s2, [#allocation4]
    $region25: #{tpu_custom_call.1} parent=1 // pred_fallthru
      _
    // Predicated region
    $region26: #{tpu_custom_call.1} parent=1 // pred_check
      _
    $region27: #{tpu_custom_call.1} parent=1 // pred_check_branch
      %252 = sbr.rel (0) target = $region29
    $region28: #{tpu_custom_call.1} parent=1 // pred_region
      %253 = dma.done [#allocation4], 128
    $region29: #{tpu_custom_call.1} parent=1 // pred_fallthru
      _
    %254 = vsyncpa [#allocation3], 1
    %255 = vsyncpa [#allocation6], 1
    %256 = vsyncpa [#allocation4], 1

</llo_original>
